<compile_context>
chip_gen: v7x
topology: tpu7x:2x2x1
jax: 0.10.0
libtpu: 0.0.40
codegen_flags: <defaults>
</compile_context>

<pallas_src>
import functools

import jax
import jax.numpy as jnp
from jax.experimental import pallas as pl
from jax.experimental.pallas import tpu as pltpu


def _coeffs_linear_kernel(x_ref, w_ref, o_ref):
    # x_ref: (tm, n_combinations)          -- one batch tile
    # w_ref: (n_features, n_combinations)  -- PyTorch nn.Linear layout, NOT transposed
    # o_ref: (n_features, tm)              -- output transposed: batch on lane axis
    #
    # y_T[f, b] = sum_c W[f, c] * x[b, c]   (contract the shared last dim of both)
    o_ref[...] = jax.lax.dot_general(
        w_ref[...],
        x_ref[...],
        dimension_numbers=(((1,), (1,)), ((), ())),
        preferred_element_type=jnp.float32,
    ).astype(o_ref.dtype)


@functools.partial(jax.jit, static_argnames=("block_batch",))
def coeffs_network_forward(x, weight, *, block_batch: int = 512):
    """Forward pass of coeffs_network: y = x @ weight.T (no bias).

    x:      (batch, n_combinations) float32
    weight: (n_features, n_combinations) float32  (PyTorch nn.Linear layout)
    returns (batch, n_features) float32
    """
    batch, n_comb = x.shape
    n_feat, n_comb_w = weight.shape
    assert n_comb == n_comb_w, "x / weight contraction-dim mismatch"

    # Batch tile: whole batch if small, otherwise a 128-aligned tile.
    tm = batch if batch <= block_batch else block_batch
    padded = pl.cdiv(batch, tm) * tm
    if padded != batch:
        x = jnp.pad(x, ((0, padded - batch), (0, 0)))
    grid = (padded // tm,)

    # TODO(synk): if precision allows and shapes grow, cast x/weight to bf16 at
    # this boundary (keep preferred_element_type=f32) for ~3x MXU throughput on
    # v6e/v7x and half the HBM bytes.
    y_t = pl.pallas_call(
        _coeffs_linear_kernel,
        out_shape=jax.ShapeDtypeStruct((n_feat, padded), jnp.float32),
        grid_spec=pltpu.PrefetchScalarGridSpec(
            num_scalar_prefetch=0,
            grid=grid,
            in_specs=[
                # x tile: batch on sublane, n_combinations on lane (full extent).
                pl.BlockSpec(
                    (tm, n_comb),
                    lambda i: (i, 0),
                    memory_space=pltpu.MemorySpace.VMEM,
                ),
                # weight: tiny, resident for all grid steps.
                pl.BlockSpec(
                    (n_feat, n_comb),
                    lambda i: (0, 0),
                    memory_space=pltpu.MemorySpace.VMEM,
                ),
            ],
            # Output transposed: batch on the lane axis -> lane-dense stores.
            out_specs=pl.BlockSpec(
                (n_feat, tm),
                lambda i: (0, i),
                memory_space=pltpu.MemorySpace.VMEM,
            ),
        ),
        compiler_params=pltpu.CompilerParams(
            # Batch tiles are independent -> shard across both TCs on v7x.
            dimension_semantics=("parallel",),
        ),
        cost_estimate=pl.CostEstimate(
            flops=2 * padded * n_comb * n_feat,
            transcendentals=0,
            bytes_accessed=4 * (padded * n_comb + n_feat * n_comb + padded * n_feat),
        ),
    )(x, weight)

    # Cheap wrapper-side transpose back to the PyTorch output layout, then drop
    # any batch padding.
    return y_t.T[:batch]


if __name__ == "__main__":
    n_combinations = 6
    n_features = 2
    batch = 8

    key = jax.random.PRNGKey(0)
    kx, kw, kx2 = jax.random.split(key, 3)

    # --- Test 1: random weight (catches transposed-operand / layout bugs) ---
    x = jax.random.normal(kx, (batch, n_combinations), dtype=jnp.float32)
    w_rand = jax.random.normal(kw, (n_features, n_combinations), dtype=jnp.float32)
    y = jax.block_until_ready(coeffs_network_forward(x, w_rand))
    y_ref = x @ w_rand.T
    assert y.shape == (batch, n_features)
    assert jnp.allclose(y, y_ref, atol=1e-5, rtol=1e-5), "mismatch vs reference (random W)"

    # --- Test 2: the module's actual init (weight zeroed in __init__) ---
    w_zero = jnp.zeros((n_features, n_combinations), dtype=jnp.float32)
    y0 = jax.block_until_ready(coeffs_network_forward(x, w_zero))
    assert jnp.allclose(y0, jnp.zeros((batch, n_features), jnp.float32), atol=1e-6)

    # --- Test 3: multi-tile grid path (non-divisible batch, padding + grid) ---
    big_batch = 300
    xb = jax.random.normal(kx2, (big_batch, n_combinations), dtype=jnp.float32)
    yb = jax.block_until_ready(coeffs_network_forward(xb, w_rand, block_batch=128))
    yb_ref = xb @ w_rand.T
    assert yb.shape == (big_batch, n_features)
    assert jnp.allclose(yb, yb_ref, atol=1e-5, rtol=1e-5), "mismatch vs reference (gridded)"

    print("KERNEL_OK")
</pallas_src>

<mosaic_0001>
module attributes {stable_mosaic.version = 11 : i64} {
  func.func @_coeffs_linear_kernel(%arg0: i32, %arg1: memref<8x6xf32, #tpu.memory_space<vmem>>, %arg2: memref<2x6xf32, #tpu.memory_space<vmem>>, %arg3: memref<2x8xf32, #tpu.memory_space<vmem>>) attributes {dimension_semantics = [#tpu.dimension_semantics<parallel>], iteration_bounds = array<i64: 1>, scalar_prefetch = 0 : i64, scratch_operands = 0 : i64, tpu.core_type = #tpu.core_type<tc>, window_params = [{transform_indices = @transform_0, window_bounds = array<i64: 8, 6>}, {pipeline_mode = #tpu.pipeline_mode<synchronous>, transform_indices = @transform_1, window_bounds = array<i64: 2, 6>}, {transform_indices = @transform_2, window_bounds = array<i64: 2, 8>}]} {
    %c0 = arith.constant 0 : index
    %c0_0 = arith.constant 0 : index
    %0 = vector.load %arg2[%c0, %c0_0] : memref<2x6xf32, #tpu.memory_space<vmem>>, vector<2x6xf32>
    %c0_1 = arith.constant 0 : index
    %c0_2 = arith.constant 0 : index
    %1 = vector.load %arg1[%c0_1, %c0_2] : memref<8x6xf32, #tpu.memory_space<vmem>>, vector<8x6xf32>
    %cst = arith.constant dense<0.000000e+00> : vector<2x8xf32>
    %2 = tpu.matmul %0, %1, %cst {dimension_numbers = #tpu.dot_dimension_numbers<[1], [1], [0], [0], [0, 0, 1, 0], [], []>} : vector<2x6xf32>, vector<8x6xf32>, vector<2x8xf32> -> vector<2x8xf32>
    %c0_3 = arith.constant 0 : index
    %c0_4 = arith.constant 0 : index
    %3 = vector.load %arg3[%c0_3, %c0_4] : memref<2x8xf32, #tpu.memory_space<vmem>>, vector<2x8xf32>
    tpu.vector_store %arg3[%c0_3, %c0_4], %2 {strides = array<i32>} : memref<2x8xf32, #tpu.memory_space<vmem>>, vector<2x8xf32>,
    return
  }
  func.func @transform_0(%arg0: i32) -> (i32, i32) {
    %c0_i32 = arith.constant 0 : i32
    %c0_i32_0 = arith.constant 0 : i32
    return %arg0, %c0_i32 : i32, i32
  }
  func.func @transform_1(%arg0: i32) -> (i32, i32) {
    %c0_i32 = arith.constant 0 : i32
    %c0_i32_0 = arith.constant 0 : i32
    %c0_i32_1 = arith.constant 0 : i32
    return %c0_i32, %c0_i32_0 : i32, i32
  }
  func.func @transform_2(%arg0: i32) -> (i32, i32) {
    %c0_i32 = arith.constant 0 : i32
    %c0_i32_0 = arith.constant 0 : i32
    return %c0_i32, %arg0 : i32, i32
  }
}

</mosaic_0001>

<llo_original>
// kernel: coeffs_network_forward.1
$region0: #{coeffs_network_forward.1}
  #allocation0 [shape = 'u32[]', space=smem, size = 0x4, offset = 0x4, fixed_abs, tag = 'smem constant byte address 0x4 - core index']
  #allocation1 [shape = 'u32[144,128]{1,0:T(1,128)}', space=vmem, size = 0x12000, scoped, tag = 'internal scratch']
  %s0 = inlined_call_operand.hbm [shape: f32[8,6], index: 0, kind: input, shape index: {}]
  %s1 = inlined_call_operand.vmem [shape: f32[2,6], index: 1, kind: input, shape index: {}]
  %s2 = inlined_call_operand.hbm [shape: f32[2,8], index: 2, kind: output, shape index: {}]
  %s3 = sld [smem:[#allocation0]]
  $region22: #{coeffs_network_forward.1} parent=0
    _
  %s5 = ssub.s32 1, %s3
  %s6 = scalar_select 0, %s5, %s3
  $region1: #{coeffs_network_forward.1} parent=0
    #allocation2 [shape = 'u8[4096]{0}', space=vmem, size = 0x1000, scoped, tag = 'input window, operand 0, single buffered']
    #allocation3 [shape = 's32[1]{0}', space=sflag, size = 0x4, scoped, tag = 'scoped memory for coeffs_network_forward.1']
    #allocation4 [shape = 's32[1]{0}', space=sflag, size = 0x4, scoped, tag = 'scoped memory for coeffs_network_forward.1']
    #allocation5 [shape = 'u8[1024]{0}', space=vmem, size = 0x400, scoped, tag = 'output window, operand 0, single buffered']
    %7 = vsyncpa [#allocation3], 0
    %8 = vsyncpa [#allocation4], 0
    // Predicated region
    $region2: #{coeffs_network_forward.1} parent=1 // pred_check
      _
    $region3: #{coeffs_network_forward.1} parent=1 // pred_check_branch
      %10 = sbr.rel (0) target = $region5
    $region4: #{coeffs_network_forward.1} parent=1 // pred_region
      %s12 = ssub.s32 128, 128
      %13 = vsyncadd [#allocation3], %s12
      %s15 = sshll.u32 [#allocation2], 4
      %s16 = int_to_ptr.vmem [resolvable:$true] %s15
      %18 = dma.hbm_to_vmem [thread:$0]  %s0, 128, %s16, [#allocation3]
    $region5: #{coeffs_network_forward.1} parent=1 // pred_fallthru
      _
    // Predicated region
    $region6: #{coeffs_network_forward.1} parent=1 // pred_check
      _
    $region7: #{coeffs_network_forward.1} parent=1 // pred_check_branch
      %20 = sbr.rel (0) target = $region9
    $region8: #{coeffs_network_forward.1} parent=1 // pred_region
      _
    $region9: #{coeffs_network_forward.1} parent=1 // pred_fallthru
      _
    // Predicated region
    $region10: #{coeffs_network_forward.1} parent=1 // pred_check
      _
    $region11: #{coeffs_network_forward.1} parent=1 // pred_check_branch
      %22 = sbr.rel (0) target = $region13
    $region12: #{coeffs_network_forward.1} parent=1 // pred_region
      %23 = dma.done [#allocation3], 128
    $region13: #{coeffs_network_forward.1} parent=1 // pred_fallthru
      _
    %v24 = vld [vmem:[%s1] sm:$0x3]
    %v25 = vld [vmem:[#allocation2] sm:$0xff]
    %vm26 = vcmask 48128
    %v28 = vsel %vm26, %v24, 0
    %v31 = vsel %vm26, %v25, 0
    %33 = vmatprep.subr.mxu0 0.0
    %34 = vmatpush1.xpose.msra.mxu0 %v31
    %35 = vmatprep.subr.mxu0 0.0
    %36 = vmatpush1.xpose.msra.mxu0 0.0
    %37 = vmatprep.subr.mxu0 0.0
    %38 = vmatpush1.xpose.msra.mxu0 0.0
    %39 = vmatprep.subr.mxu0 0.0
    %40 = vmatpush1.xpose.msra.mxu0 0.0
    %41 = vmatprep.subr.mxu0 0.0
    %42 = vmatpush1.xpose.msra.mxu0 0.0
    %43 = vmatprep.subr.mxu0 0.0
    %44 = vmatpush1.xpose.msra.mxu0 0.0
    %45 = vmatprep.subr.mxu0 0.0
    %46 = vmatpush1.xpose.msra.mxu0 0.0
    %47 = vmatprep.subr.mxu0 0.0
    %48 = vmatpush1.xpose.msra.mxu0 0.0
    %49 = vmatprep.subr.mxu0 0.0
    %50 = vmatpush1.xpose.msra.mxu0 0.0
    %51 = vmatprep.subr.mxu0 0.0
    %52 = vmatpush1.xpose.msra.mxu0 0.0
    %53 = vmatprep.subr.mxu0 0.0
    %54 = vmatpush1.xpose.msra.mxu0 0.0
    %55 = vmatprep.subr.mxu0 0.0
    %56 = vmatpush1.xpose.msra.mxu0 0.0
    %57 = vmatprep.subr.mxu0 0.0
    %58 = vmatpush1.xpose.msra.mxu0 0.0
    %59 = vmatprep.subr.mxu0 0.0
    %60 = vmatpush1.xpose.msra.mxu0 0.0
    %61 = vmatprep.subr.mxu0 0.0
    %62 = vmatpush1.xpose.msra.mxu0 0.0
    %63 = vmatprep.subr.mxu0 0.0
    %64 = vmatpush1.xpose.msra.mxu0 0.0
    %65 = vmatprep.subr.mxu0 0.0
    %66 = vmatpush1.xpose.msra.mxu0 0.0
    %67 = vmatprep.subr.mxu0 0.0
    %68 = vmatpush1.xpose.msra.mxu0 0.0
    %69 = vmatprep.subr.mxu0 0.0
    %70 = vmatpush1.xpose.msra.mxu0 0.0
    %71 = vmatprep.subr.mxu0 0.0
    %72 = vmatpush1.xpose.msra.mxu0 0.0
    %73 = vmatprep.subr.mxu0 0.0
    %74 = vmatpush1.xpose.msra.mxu0 0.0
    %75 = vmatprep.subr.mxu0 0.0
    %76 = vmatpush1.xpose.msra.mxu0 0.0
    %77 = vmatprep.subr.mxu0 0.0
    %78 = vmatpush1.xpose.msra.mxu0 0.0
    %79 = vmatprep.subr.mxu0 0.0
    %80 = vmatpush1.xpose.msra.mxu0 0.0
    %81 = vmatprep.subr.mxu0 0.0
    %82 = vmatpush1.xpose.msra.mxu0 0.0
    %83 = vmatprep.subr.mxu0 0.0
    %84 = vmatpush1.xpose.msra.mxu0 0.0
    %85 = vmatprep.subr.mxu0 0.0
    %86 = vmatpush1.xpose.msra.mxu0 0.0
    %87 = vmatprep.subr.mxu0 0.0
    %88 = vmatpush1.xpose.msra.mxu0 0.0
    %89 = vmatprep.subr.mxu0 0.0
    %90 = vmatpush1.xpose.msra.mxu0 0.0
    %91 = vmatprep.subr.mxu0 0.0
    %92 = vmatpush1.xpose.msra.mxu0 0.0
    %93 = vmatprep.subr.mxu0 0.0
    %94 = vmatpush1.xpose.msra.mxu0 0.0
    %95 = vmatprep.subr.mxu0 0.0
    %96 = vmatpush1.xpose.msra.mxu0 0.0
    %97 = vmatprep.mubr.f32.mxu0 0.0
    %98 = vmatmul.mubr.f32.gmra.mrb[0].mxu0 %v28
    %v99 = vpop.f32.mrb[0].mxu0
    %v100 = vadd.f32 0.0, %v99
    %v101 = vpop.f32.mrb[0].mxu0
    %102 = vdwg.mxu0
    %vm103 = vcmask 58368
    %104 = vst.msk [vmem:[#allocation5] sm:$0x3] %vm103, %v100
    // Predicated region
    $region14: #{coeffs_network_forward.1} parent=1 // pred_check
      _
    $region15: #{coeffs_network_forward.1} parent=1 // pred_check_branch
      %106 = sbr.rel (0) target = $region17
    $region16: #{coeffs_network_forward.1} parent=1 // pred_region
      %s108 = ssub.s32 32, 32
      %109 = vsyncadd [#allocation4], %s108
      %s111 = sshll.u32 [#allocation5], 4
      %s112 = int_to_ptr.vmem [resolvable:$true] %s111
      %114 = dma.vmem_to_hbm [thread:$0]  %s112, 32, %s2, [#allocation4]
    $region17: #{coeffs_network_forward.1} parent=1 // pred_fallthru
      _
    // Predicated region
    $region18: #{coeffs_network_forward.1} parent=1 // pred_check
      _
    $region19: #{coeffs_network_forward.1} parent=1 // pred_check_branch
      %116 = sbr.rel (0) target = $region21
    $region20: #{coeffs_network_forward.1} parent=1 // pred_region
      %117 = dma.done [#allocation4], 32
    $region21: #{coeffs_network_forward.1} parent=1 // pred_fallthru
      _
    %118 = vsyncpa [#allocation3], 1
    %119 = vsyncpa [#allocation4], 1

</llo_original>
